<compile_context>
chip_gen: v6e
topology: v6e:2x2x1
jax: 0.10.0
libtpu: 0.0.40
codegen_flags: <defaults>
</compile_context>

<pallas_src>
import functools

import jax
import jax.numpy as jnp
from jax.experimental import pallas as pl
from jax.experimental.pallas import tpu as pltpu

_LANES = 128
_H1, _H2, _H3 = 256, 128, 64


def _loss_attention_kernel(bag_ref, w1_ref, w2_ref, w3_ref, wc_ref, bias_ref,
                           slab_ref, *, n_class):
    f32 = jnp.float32
    bag = bag_ref[...]                                   # (N, ins_len)
    n_rows = bag.shape[0]

    # Biases are packed as rows of a single (4, 256) buffer (zero-padded on the right).
    b1 = bias_ref[0:1, :]                                # (1, 256)
    b2 = bias_ref[1:2, 0:_H2]                            # (1, 128)
    b3 = bias_ref[2:3, 0:_H3]                            # (1, 64)
    bc = bias_ref[3:4, 0:_LANES]                         # (1, 128), zeros past n_class

    # 3-layer MLP with ReLU (dropout == identity in eval mode).
    h1 = jnp.maximum(jnp.dot(bag, w1_ref[...], preferred_element_type=f32) + b1, 0.0)
    h2 = jnp.maximum(jnp.dot(h1, w2_ref[...], preferred_element_type=f32) + b2, 0.0)
    h3 = jnp.maximum(jnp.dot(h2, w3_ref[...], preferred_element_type=f32) + b3, 0.0)

    # Lane-dense classifier pass: wc is (64, 128) with zero-padded columns and bc has
    # zero padding, so lanes >= n_class of out_c_full are exactly 0.
    out_c_full = jnp.dot(h3, wc_ref[...], preferred_element_type=f32) + bc   # (N, 128)

    lane = jax.lax.broadcasted_iota(jnp.int32, out_c_full.shape, 1)
    class_mask = lane < n_class

    # AttentionLayer (flag == 1): global max, exp, row sums, normalize over rows.
    neg = jnp.where(class_mask, out_c_full, -jnp.inf)
    gmax = jnp.max(neg)                                  # global max over real classes
    e = jnp.exp(neg - gmax)                              # padded lanes -> exp(-inf) = 0
    s = jnp.sum(e, axis=1, keepdims=True)                # (N, 1)
    alpha = s / jnp.sum(s, axis=0, keepdims=True)        # (N, 1)

    context = h3 * (jnp.float32(n_rows) * alpha)         # (N, 64)
    out_m = jnp.mean(context, axis=0, keepdims=True)     # (1, 64)

    # Pack into the lane-dense slab:
    #   rows [0:N]: lanes [0:n_class] = out_c, lane n_class = alpha, rest 0
    #   row   N   : lanes [0:64]      = out_m, rest 0
    rows = (jnp.where(class_mask, out_c_full, 0.0)
            + jnp.where(lane == n_class, alpha, 0.0))    # (N, 128)
    slab_ref[0:n_rows, :] = rows

    outm_row = jnp.concatenate(
        [out_m, jnp.zeros((1, _LANES - _H3), f32)], axis=1)   # (1, 128)
    slab_ref[n_rows:n_rows + 1, :] = outm_row


def loss_attention_forward_batched(bags, params, *, vmem_limit_bytes=32 * 1024 * 1024):
    """bags: (B, N, ins_len). Returns (y (B,1,C), out_c (B,N,C), alpha (B,N), out (B,1,64))."""
    bags = bags.astype(jnp.float32)
    B, N, ins_len = bags.shape
    n_class = params["w"].shape[0]
    assert n_class < _LANES, "output packing assumes n_class < 128"

    # Glue: transpose PyTorch (out, in) weights to (in, out); pad classifier weight to a
    # lane-dense (64, 128) tile; fold all biases into one (4, 256) buffer.
    w1t = params["w1"].T.astype(jnp.float32)                              # (ins_len, 256)
    w2t = params["w2"].T.astype(jnp.float32)                              # (256, 128)
    w3t = params["w3"].T.astype(jnp.float32)                              # (128, 64)
    wct = jnp.zeros((_H3, _LANES), jnp.float32).at[:, :n_class].set(
        params["w"].T.astype(jnp.float32))                                # (64, 128)

    def _row(v):
        v = v.astype(jnp.float32)
        return jnp.zeros((_H1,), jnp.float32).at[: v.shape[0]].set(v)

    biases = jnp.stack([_row(params["b1"]), _row(params["b2"]),
                        _row(params["b3"]), _row(params["b"])])           # (4, 256)

    # Crude VMEM budget check: weights are pinned, the whole bag + activations live in
    # VMEM per grid step (conservative 2x / 4x factors for double-buffering + temps).
    weight_bytes = 4 * (w1t.size + w2t.size + w3t.size + wct.size + biases.size)
    per_bag_bytes = 4 * N * (ins_len + _H1 + _H2 + _H3 + 3 * _LANES) + 4 * (N + 1) * _LANES
    est = 2 * weight_bytes + 4 * per_bag_bytes
    assert est < vmem_limit_bytes, (
        f"bag too large for whole-bag VMEM residency (est {est} B >= {vmem_limit_bytes} B); "
        "reduce N or add row tiling")

    kernel = functools.partial(_loss_attention_kernel, n_class=n_class)
    slab = pl.pallas_call(
        kernel,
        out_shape=jax.ShapeDtypeStruct((B, N + 1, _LANES), jnp.float32),
        grid=(B,),
        in_specs=[
            pl.BlockSpec((None, N, ins_len), lambda b: (b, 0, 0)),   # per-bag block
            pl.BlockSpec(w1t.shape, lambda b: (0, 0)),               # pinned weights
            pl.BlockSpec(w2t.shape, lambda b: (0, 0)),
            pl.BlockSpec(w3t.shape, lambda b: (0, 0)),
            pl.BlockSpec(wct.shape, lambda b: (0, 0)),
            pl.BlockSpec(biases.shape, lambda b: (0, 0)),
        ],
        out_specs=pl.BlockSpec((None, N + 1, _LANES), lambda b: (b, 0, 0)),
        compiler_params=pltpu.CompilerParams(
            dimension_semantics=("parallel",),
            vmem_limit_bytes=vmem_limit_bytes),
    )(bags, w1t, w2t, w3t, wct, biases)

    out_c = slab[:, :N, :n_class]                                     # (B, N, n_class)
    alpha = slab[:, :N, n_class]                                      # (B, N)
    out_m = slab[:, N, :_H3][:, None, :]                              # (B, 1, 64)
    # Tiny classifier head in the wrapper (removed from the kernel's critical path).
    y = out_m @ params["w"].T.astype(jnp.float32) + params["b"].astype(jnp.float32)
    return y, out_c, alpha, out_m


def loss_attention_forward(bag, params):
    """Single bag (N, ins_len) — same signature/outputs as the PyTorch module (flag=1)."""
    y, out_c, alpha, out_m = loss_attention_forward_batched(bag[None], params)
    return y[0], out_c[0], alpha[0], out_m[0]


def _reference_forward(bag, params):
    """Pure-JAX reference mirroring the PyTorch forward (eval-mode dropout)."""
    bag = bag.astype(jnp.float32)
    h1 = jax.nn.relu(bag @ params["w1"].T + params["b1"])
    h2 = jax.nn.relu(h1 @ params["w2"].T + params["b2"])
    h3 = jax.nn.relu(h2 @ params["w3"].T + params["b3"])
    out_c = h3 @ params["w"].T + params["b"]
    e = jnp.exp(out_c - jnp.max(out_c))
    s = jnp.sum(e, axis=1, keepdims=True)
    alpha = s / jnp.sum(s, axis=0, keepdims=True)
    context = h3 * (bag.shape[0] * alpha)
    out_m = jnp.mean(context, axis=0, keepdims=True)
    y = out_m @ params["w"].T + params["b"]
    return y, out_c, jnp.squeeze(alpha), out_m


if __name__ == "__main__":
    # Small shapes consistent with the module: B=4 bags, N=8 instances, ins_len=32, n_class=4.
    B, N, INS_LEN, N_CLASS = 4, 8, 32, 4

    key = jax.random.PRNGKey(0)
    ks = jax.random.split(key, 10)

    def init_linear(kw, kb, out_f, in_f):
        bound = 1.0 / jnp.sqrt(in_f)
        w = jax.random.uniform(kw, (out_f, in_f), jnp.float32, -bound, bound)
        b = jax.random.uniform(kb, (out_f,), jnp.float32, -bound, bound)
        return w, b

    w1, b1 = init_linear(ks[0], ks[1], 256, INS_LEN)
    w2, b2 = init_linear(ks[2], ks[3], 128, 256)
    w3, b3 = init_linear(ks[4], ks[5], 64, 128)
    w, b = init_linear(ks[6], ks[7], N_CLASS, 64)
    params = {"w1": w1, "b1": b1, "w2": w2, "b2": b2,
              "w3": w3, "b3": b3, "w": w, "b": b}

    bags = jax.random.normal(ks[8], (B, N, INS_LEN), jnp.float32)

    # Batched path (grid over bags, weights pinned in VMEM).
    outs = loss_attention_forward_batched(bags, params)
    outs = jax.block_until_ready(outs)

    refs = jax.vmap(_reference_forward, in_axes=(0, None))(bags, params)
    for o, r in zip(outs, refs):
        assert o.shape == r.shape, (o.shape, r.shape)
        assert jnp.allclose(o, r, atol=1e-5, rtol=1e-5), float(jnp.max(jnp.abs(o - r)))

    # Single-bag path matching the PyTorch module's forward signature.
    outs1 = loss_attention_forward(bags[0], params)
    outs1 = jax.block_until_ready(outs1)
    refs1 = _reference_forward(bags[0], params)
    for o, r in zip(outs1, refs1):
        assert o.shape == r.shape, (o.shape, r.shape)
        assert jnp.allclose(o, r, atol=1e-5, rtol=1e-5), float(jnp.max(jnp.abs(o - r)))

    print("KERNEL_OK")
</pallas_src>

<mosaic_0001>
module attributes {stable_mosaic.version = 11 : i64} {
  func.func @_loss_attention_kernel(%arg0: i32, %arg1: memref<1x8x32xf32, #tpu.memory_space<vmem>>, %arg2: memref<32x256xf32, #tpu.memory_space<vmem>>, %arg3: memref<256x128xf32, #tpu.memory_space<vmem>>, %arg4: memref<128x64xf32, #tpu.memory_space<vmem>>, %arg5: memref<64x128xf32, #tpu.memory_space<vmem>>, %arg6: memref<4x256xf32, #tpu.memory_space<vmem>>, %arg7: memref<1x9x128xf32, #tpu.memory_space<vmem>>) attributes {dimension_semantics = [#tpu.dimension_semantics<parallel>], iteration_bounds = array<i64: 4>, scalar_prefetch = 0 : i64, scratch_operands = 0 : i64, tpu.core_type = #tpu.core_type<tc>, window_params = [{transform_indices = @transform_0, window_bounds = array<i64: 1, 8, 32>}, {pipeline_mode = #tpu.pipeline_mode<synchronous>, transform_indices = @transform_1, window_bounds = array<i64: 32, 256>}, {pipeline_mode = #tpu.pipeline_mode<synchronous>, transform_indices = @transform_2, window_bounds = array<i64: 256, 128>}, {pipeline_mode = #tpu.pipeline_mode<synchronous>, transform_indices = @transform_3, window_bounds = array<i64: 128, 64>}, {pipeline_mode = #tpu.pipeline_mode<synchronous>, transform_indices = @transform_4, window_bounds = array<i64: 64, 128>}, {pipeline_mode = #tpu.pipeline_mode<synchronous>, transform_indices = @transform_5, window_bounds = array<i64: 4, 256>}, {transform_indices = @transform_6, window_bounds = array<i64: 1, 9, 128>}]} {
    %c0 = arith.constant 0 : index
    %c0_0 = arith.constant 0 : index
    %c0_1 = arith.constant 0 : index
    %0 = vector.load %arg1[%c0, %c0_0, %c0_1] : memref<1x8x32xf32, #tpu.memory_space<vmem>>, vector<1x8x32xf32>
    %1 = vector.shape_cast %0 : vector<1x8x32xf32> to vector<8x32xf32>
    %c0_2 = arith.constant 0 : index
    %c0_3 = arith.constant 0 : index
    %2 = vector.load %arg6[%c0_2, %c0_3] : memref<4x256xf32, #tpu.memory_space<vmem>>, vector<1x256xf32>
    %c1 = arith.constant 1 : index
    %c0_4 = arith.constant 0 : index
    %3 = vector.load %arg6[%c1, %c0_4] : memref<4x256xf32, #tpu.memory_space<vmem>>, vector<1x128xf32>
    %c2 = arith.constant 2 : index
    %c0_5 = arith.constant 0 : index
    %4 = vector.load %arg6[%c2, %c0_5] : memref<4x256xf32, #tpu.memory_space<vmem>>, vector<1x64xf32>
    %c3 = arith.constant 3 : index
    %c0_6 = arith.constant 0 : index
    %5 = vector.load %arg6[%c3, %c0_6] : memref<4x256xf32, #tpu.memory_space<vmem>>, vector<1x128xf32>
    %c0_7 = arith.constant 0 : index
    %c0_8 = arith.constant 0 : index
    %6 = vector.load %arg2[%c0_7, %c0_8] : memref<32x256xf32, #tpu.memory_space<vmem>>, vector<32x256xf32>
    %cst = arith.constant dense<0.000000e+00> : vector<8x256xf32>
    %7 = tpu.matmul %1, %6, %cst {dimension_numbers = #tpu.dot_dimension_numbers<[1], [0], [0], [1], [0, 0, 1, 1], [], []>} : vector<8x32xf32>, vector<32x256xf32>, vector<8x256xf32> -> vector<8x256xf32>
    %8 = vector.broadcast %2 : vector<1x256xf32> to vector<8x256xf32>
    %9 = arith.addf %7, %8 : vector<8x256xf32>
    %cst_9 = arith.constant 0.000000e+00 : f32
    %10 = vector.broadcast %cst_9 : f32 to vector<8x256xf32>
    %11 = arith.maximumf %9, %10 : vector<8x256xf32>
    %c0_10 = arith.constant 0 : index
    %c0_11 = arith.constant 0 : index
    %12 = vector.load %arg3[%c0_10, %c0_11] : memref<256x128xf32, #tpu.memory_space<vmem>>, vector<256x128xf32>
    %cst_12 = arith.constant dense<0.000000e+00> : vector<8x128xf32>
    %13 = tpu.matmul %11, %12, %cst_12 {dimension_numbers = #tpu.dot_dimension_numbers<[1], [0], [0], [1], [0, 0, 1, 1], [], []>} : vector<8x256xf32>, vector<256x128xf32>, vector<8x128xf32> -> vector<8x128xf32>
    %14 = vector.broadcast %3 : vector<1x128xf32> to vector<8x128xf32>
    %15 = arith.addf %13, %14 : vector<8x128xf32>
    %cst_13 = arith.constant 0.000000e+00 : f32
    %16 = vector.broadcast %cst_13 : f32 to vector<8x128xf32>
    %17 = arith.maximumf %15, %16 : vector<8x128xf32>
    %c0_14 = arith.constant 0 : index
    %c0_15 = arith.constant 0 : index
    %18 = vector.load %arg4[%c0_14, %c0_15] : memref<128x64xf32, #tpu.memory_space<vmem>>, vector<128x64xf32>
    %cst_16 = arith.constant dense<0.000000e+00> : vector<8x64xf32>
    %19 = tpu.matmul %17, %18, %cst_16 {dimension_numbers = #tpu.dot_dimension_numbers<[1], [0], [0], [1], [0, 0, 1, 1], [], []>} : vector<8x128xf32>, vector<128x64xf32>, vector<8x64xf32> -> vector<8x64xf32>
    %20 = vector.broadcast %4 : vector<1x64xf32> to vector<8x64xf32>
    %21 = arith.addf %19, %20 : vector<8x64xf32>
    %cst_17 = arith.constant 0.000000e+00 : f32
    %22 = vector.broadcast %cst_17 : f32 to vector<8x64xf32>
    %23 = arith.maximumf %21, %22 : vector<8x64xf32>
    %c0_18 = arith.constant 0 : index
    %c0_19 = arith.constant 0 : index
    %24 = vector.load %arg5[%c0_18, %c0_19] : memref<64x128xf32, #tpu.memory_space<vmem>>, vector<64x128xf32>
    %cst_20 = arith.constant dense<0.000000e+00> : vector<8x128xf32>
    %25 = tpu.matmul %23, %24, %cst_20 {dimension_numbers = #tpu.dot_dimension_numbers<[1], [0], [0], [1], [0, 0, 1, 1], [], []>} : vector<8x64xf32>, vector<64x128xf32>, vector<8x128xf32> -> vector<8x128xf32>
    %26 = vector.broadcast %5 : vector<1x128xf32> to vector<8x128xf32>
    %27 = arith.addf %25, %26 : vector<8x128xf32>
    %28 = tpu.iota {dimensions = array<i32: 1>} : vector<8x128xi32>
    %c4_i32 = arith.constant 4 : i32
    %29 = vector.broadcast %c4_i32 : i32 to vector<8x128xi32>
    %30 = arith.cmpi slt, %28, %29 : vector<8x128xi32>
    %cst_21 = arith.constant 0xFF800000 : f32
    %31 = vector.broadcast %cst_21 : f32 to vector<8x128xf32>
    %32 = arith.select %30, %27, %31 : vector<8x128xi1>, vector<8x128xf32>
    %33 = vector.shape_cast %32 : vector<8x128xf32> to vector<1x8x128xf32>
    %cst_22 = arith.constant dense<0xFF800000> : vector<1xf32>
    %34 = vector.multi_reduction <maximumf>, %33, %cst_22 [1, 2] : vector<1x8x128xf32> to vector<1xf32>
    %35 = vector.shape_cast %34 : vector<1xf32> to vector<1x1x1xf32>
    %36 = vector.extract %35[0, 0, 0] : f32 from vector<1x1x1xf32>
    %37 = vector.broadcast %36 : f32 to vector<8x128xf32>
    %38 = arith.subf %32, %37 : vector<8x128xf32>
    %39 = math.exp %38 : vector<8x128xf32>
    %cst_23 = arith.constant dense<0.000000e+00> : vector<8xf32>
    %40 = vector.multi_reduction <add>, %39, %cst_23 [1] : vector<8x128xf32> to vector<8xf32>
    %41 = vector.shape_cast %40 : vector<8xf32> to vector<8x1xf32>
    %cst_24 = arith.constant dense<0.000000e+00> : vector<1xf32>
    %42 = vector.multi_reduction <add>, %41, %cst_24 [0] : vector<8x1xf32> to vector<1xf32>
    %43 = vector.shape_cast %42 : vector<1xf32> to vector<1x1xf32>
    %44 = vector.broadcast %43 : vector<1x1xf32> to vector<8x1xf32>
    %45 = arith.divf %41, %44 : vector<8x1xf32>
    %cst_25 = arith.constant 8.000000e+00 : f32
    %46 = vector.broadcast %cst_25 : f32 to vector<8x1xf32>
    %47 = arith.mulf %46, %45 : vector<8x1xf32>
    %48 = vector.broadcast %47 : vector<8x1xf32> to vector<8x64xf32>
    %49 = arith.mulf %23, %48 : vector<8x64xf32>
    %cst_26 = arith.constant dense<0.000000e+00> : vector<64xf32>
    %50 = vector.multi_reduction <add>, %49, %cst_26 [0] : vector<8x64xf32> to vector<64xf32>
    %51 = vector.shape_cast %50 : vector<64xf32> to vector<1x64xf32>
    %cst_27 = arith.constant 8.000000e+00 : f32
    %52 = vector.broadcast %cst_27 : f32 to vector<1x64xf32>
    %53 = arith.divf %51, %52 : vector<1x64xf32>
    %cst_28 = arith.constant 0.000000e+00 : f32
    %54 = vector.broadcast %cst_28 : f32 to vector<8x128xf32>
    %55 = arith.select %30, %27, %54 : vector<8x128xi1>, vector<8x128xf32>
    %c4_i32_29 = arith.constant 4 : i32
    %56 = vector.broadcast %c4_i32_29 : i32 to vector<8x128xi32>
    %57 = arith.cmpi eq, %28, %56 : vector<8x128xi32>
    %cst_30 = arith.constant 0.000000e+00 : f32
    %58 = vector.shape_cast %45 : vector<8x1xf32> to vector<8x1xf32>
    %59 = vector.broadcast %58 : vector<8x1xf32> to vector<8x128xf32>
    %60 = vector.broadcast %cst_30 : f32 to vector<8x128xf32>
    %61 = arith.select %57, %59, %60 : vector<8x128xi1>, vector<8x128xf32>
    %62 = arith.addf %55, %61 : vector<8x128xf32>
    %c0_31 = arith.constant 0 : index
    %c0_32 = arith.constant 0 : index
    %c0_33 = arith.constant 0 : index
    %63 = vector.load %arg7[%c0_31, %c0_32, %c0_33] : memref<1x9x128xf32, #tpu.memory_space<vmem>>, vector<1x8x128xf32>
    %64 = vector.shape_cast %63 : vector<1x8x128xf32> to vector<8x128xf32>
    %65 = vector.shape_cast %62 : vector<8x128xf32> to vector<1x8x128xf32>
    tpu.vector_store %arg7[%c0_31, %c0_32, %c0_33], %65 {strides = array<i32>} : memref<1x9x128xf32, #tpu.memory_space<vmem>>, vector<1x8x128xf32>,
    %cst_34 = arith.constant 0.000000e+00 : f32
    %66 = vector.broadcast %cst_34 : f32 to vector<1x64xf32>
    %67 = tpu.concatenate %53, %66 in 1 : vector<1x64xf32>, vector<1x64xf32> -> vector<1x128xf32>
    %c0_35 = arith.constant 0 : index
    %c8 = arith.constant 8 : index
    %c0_36 = arith.constant 0 : index
    %68 = vector.load %arg7[%c0_35, %c8, %c0_36] : memref<1x9x128xf32, #tpu.memory_space<vmem>>, vector<1x1x128xf32>
    %69 = vector.shape_cast %68 : vector<1x1x128xf32> to vector<1x128xf32>
    %70 = vector.shape_cast %67 : vector<1x128xf32> to vector<1x1x128xf32>
    tpu.vector_store %arg7[%c0_35, %c8, %c0_36], %70 {strides = array<i32>} : memref<1x9x128xf32, #tpu.memory_space<vmem>>, vector<1x1x128xf32>,
    return
  }
  func.func @transform_0(%arg0: i32) -> (i32, i32, i32) {
    %c0_i32 = arith.constant 0 : i32
    %c0_i32_0 = arith.constant 0 : i32
    %c0_i32_1 = arith.constant 0 : i32
    return %arg0, %c0_i32, %c0_i32_0 : i32, i32, i32
  }
  func.func @transform_1(%arg0: i32) -> (i32, i32) {
    %c0_i32 = arith.constant 0 : i32
    %c0_i32_0 = arith.constant 0 : i32
    %c0_i32_1 = arith.constant 0 : i32
    return %c0_i32, %c0_i32_0 : i32, i32
  }
  func.func @transform_2(%arg0: i32) -> (i32, i32) {
    %c0_i32 = arith.constant 0 : i32
    %c0_i32_0 = arith.constant 0 : i32
    %c0_i32_1 = arith.constant 0 : i32
    return %c0_i32, %c0_i32_0 : i32, i32
  }
  func.func @transform_3(%arg0: i32) -> (i32, i32) {
    %c0_i32 = arith.constant 0 : i32
    %c0_i32_0 = arith.constant 0 : i32
    %c0_i32_1 = arith.constant 0 : i32
    return %c0_i32, %c0_i32_0 : i32, i32
  }
  func.func @transform_4(%arg0: i32) -> (i32, i32) {
    %c0_i32 = arith.constant 0 : i32
    %c0_i32_0 = arith.constant 0 : i32
    %c0_i32_1 = arith.constant 0 : i32
    return %c0_i32, %c0_i32_0 : i32, i32
  }
  func.func @transform_5(%arg0: i32) -> (i32, i32) {
    %c0_i32 = arith.constant 0 : i32
    %c0_i32_0 = arith.constant 0 : i32
    %c0_i32_1 = arith.constant 0 : i32
    return %c0_i32, %c0_i32_0 : i32, i32
  }
  func.func @transform_6(%arg0: i32) -> (i32, i32, i32) {
    %c0_i32 = arith.constant 0 : i32
    %c0_i32_0 = arith.constant 0 : i32
    %c0_i32_1 = arith.constant 0 : i32
    return %arg0, %c0_i32, %c0_i32_0 : i32, i32, i32
  }
}

</mosaic_0001>

<llo_original>
// kernel: tpu_custom_call.1
$region0: #{tpu_custom_call.1}
  #allocation0 [shape = 'u32[]', space=smem, size = 0x4, offset = 0x4, fixed_abs, tag = 'smem constant byte address 0x4 - core index']
  #allocation1 [shape = 'u32[144,128]{1,0:T(1,128)}', space=vmem, size = 0x12000, scoped, tag = 'internal scratch']
  %s0 = inlined_call_operand.vmem [shape: f32[4,8,32], index: 0, kind: input, shape index: {}]
  %s1 = inlined_call_operand.vmem [shape: f32[32,256], index: 1, kind: input, shape index: {}]
  %s2 = inlined_call_operand.hbm [shape: f32[256,128], index: 2, kind: input, shape index: {}]
  %s3 = inlined_call_operand.vmem [shape: f32[128,64], index: 3, kind: input, shape index: {}]
  %s4 = inlined_call_operand.vmem [shape: f32[64,128], index: 4, kind: input, shape index: {}]
  %s5 = inlined_call_operand.vmem [shape: f32[4,256], index: 5, kind: input, shape index: {}]
  %s6 = inlined_call_operand.vmem [shape: f32[4,9,128], index: 6, kind: output, shape index: {}]
  %s7 = sld [smem:[#allocation0]]
  $region61: #{tpu_custom_call.1} parent=0
    _
  %s9 = ssub.s32 1, %s7
  %s10 = scalar_select 0, %s9, %s7
  $region1: #{tpu_custom_call.1} parent=0
    #allocation2 [shape = 'u8[131072]{0}', space=vmem, size = 0x20000, scoped, tag = 'input window, operand 2, single buffered']
    #allocation3 [shape = 's32[2]{0}', space=sflag, size = 0x8, scoped, tag = 'scoped memory for tpu_custom_call.1']
    %11 = vsyncpa [#allocation3], 0
    loop: start=0, step=1, limit=6
    $region2: #{tpu_custom_call.1} parent=1 // loop_pre_header
      _
    $region3: #{tpu_custom_call.1} parent=1 // loop_header
      %s13 = sphi 0, %s17
      %p14 = scmp.ge.s32.totalorder %s13, 6
      %s23 = sphi 0, %s25
      %s26 = sphi 0, %s23
      %s27 = sphi 0, %s26
      %s43 = sphi 0, %s27
      %s47 = sphi 0, %s47
      %s49 = sphi 0, %s47
      %s50 = sphi 0, %s49
      %s64 = sphi 0, %s50
      %s68 = sphi 0, %s68
      %s70 = sphi 0, %s68
      %s71 = sphi 0, %s70
      %s85 = sphi 0, %s71
      %s89 = sphi 0, %s89
      %s91 = sphi 0, %s89
      %s92 = sphi 0, %s91
      %s106 = sphi 0, %s92
      %s110 = sphi 0, %s110
      %s112 = sphi 0, %s110
      %s113 = sphi 0, %s112
      %s127 = sphi 0, %s113
      %s131 = sphi 0, %s131
      %s133 = sphi 0, %s131
      %s134 = sphi 0, %s133
      %s148 = sphi 0, %s134
      %s154 = sphi 0, %s156
      %s157 = sphi 0, %s154
      %s158 = sphi 0, %s157
      %s174 = sphi 0, %s158
    $region4: #{tpu_custom_call.1} parent=1 // loop_header_branch
      %16 = sbr.rel (%p14) target = $region8
    $region5: #{tpu_custom_call.1} parent=1 // loop_body
      %s18 = ssub.s32 %s13, 1
      %s19 = ssub.s32 %s13, 2
      %s20 = sadd.s32 %s13, 1
      %s21 = ssub.s32 %s13, %s20
      %p22 = scmp.eq.s32.totalorder %s21, 0
      %s24 = sadd.s32 %s23, 1
      %s25 = scalar_select %p22, %s23, %s24
      %p28 = pneg %p22
      %p29 = scmp.eq.s32.totalorder %s13, 3
      %p30 = por %p28, %p29
      %p31 = scmp.ne.s32.totalorder %s23, %s26
      %p32 = scmp.eq.s32.totalorder %s13, 0
      %p33 = por %p31, %p32
      %p34 = scmp.ne.s32.totalorder %s23, %s26
      %p35 = scmp.eq.s32.totalorder %s18, 3
      %p36 = por %p34, %p35
      %p37 = scmp.ne.s32.totalorder %s26, %s27
      %p38 = scmp.eq.s32.totalorder %s18, 0
      %p39 = por %p37, %p38
      %p40 = scmp.ne.s32.totalorder %s26, %s27
      %p41 = scmp.eq.s32.totalorder %s19, 3
      %p42 = por %p40, %p41
      %p44 = scmp.ne.s32.totalorder %s27, %s43
      %p45 = scmp.eq.s32.totalorder %s19, 0
      %p46 = por %p44, %p45
      %s48 = sadd.s32 %s47, 1
      %p51 = scmp.eq.s32.totalorder %s13, 3
      %p52 = scmp.ne.s32.totalorder %s47, %s49
      %p53 = scmp.eq.s32.totalorder %s13, 0
      %p54 = por %p52, %p53
      %p55 = scmp.ne.s32.totalorder %s47, %s49
      %p56 = scmp.eq.s32.totalorder %s18, 3
      %p57 = por %p55, %p56
      %p58 = scmp.ne.s32.totalorder %s49, %s50
      %p59 = scmp.eq.s32.totalorder %s18, 0
      %p60 = por %p58, %p59
      %p61 = scmp.ne.s32.totalorder %s49, %s50
      %p62 = scmp.eq.s32.totalorder %s19, 3
      %p63 = por %p61, %p62
      %p65 = scmp.ne.s32.totalorder %s50, %s64
      %p66 = scmp.eq.s32.totalorder %s19, 0
      %p67 = por %p65, %p66
      %s69 = sadd.s32 %s68, 1
      %p72 = scmp.eq.s32.totalorder %s13, 3
      %p73 = scmp.ne.s32.totalorder %s68, %s70
      %p74 = scmp.eq.s32.totalorder %s13, 0
      %p75 = por %p73, %p74
      %p76 = scmp.ne.s32.totalorder %s68, %s70
      %p77 = scmp.eq.s32.totalorder %s18, 3
      %p78 = por %p76, %p77
      %p79 = scmp.ne.s32.totalorder %s70, %s71
      %p80 = scmp.eq.s32.totalorder %s18, 0
      %p81 = por %p79, %p80
      %p82 = scmp.ne.s32.totalorder %s70, %s71
      %p83 = scmp.eq.s32.totalorder %s19, 3
      %p84 = por %p82, %p83
      %p86 = scmp.ne.s32.totalorder %s71, %s85
      %p87 = scmp.eq.s32.totalorder %s19, 0
      %p88 = por %p86, %p87
      %s90 = sadd.s32 %s89, 1
      %p93 = scmp.eq.s32.totalorder %s13, 3
      %p94 = scmp.ne.s32.totalorder %s89, %s91
      %p95 = scmp.eq.s32.totalorder %s13, 0
      %p96 = por %p94, %p95
      %p97 = scmp.ne.s32.totalorder %s89, %s91
      %p98 = scmp.eq.s32.totalorder %s18, 3
      %p99 = por %p97, %p98
      %p100 = scmp.ne.s32.totalorder %s91, %s92
      %p101 = scmp.eq.s32.totalorder %s18, 0
      %p102 = por %p100, %p101
      %p103 = scmp.ne.s32.totalorder %s91, %s92
      %p104 = scmp.eq.s32.totalorder %s19, 3
      %p105 = por %p103, %p104
      %p107 = scmp.ne.s32.totalorder %s92, %s106
      %p108 = scmp.eq.s32.totalorder %s19, 0
      %p109 = por %p107, %p108
      %s111 = sadd.s32 %s110, 1
      %p114 = scmp.eq.s32.totalorder %s13, 3
      %p115 = scmp.ne.s32.totalorder %s110, %s112
      %p116 = scmp.eq.s32.totalorder %s13, 0
      %p117 = por %p115, %p116
      %p118 = scmp.ne.s32.totalorder %s110, %s112
      %p119 = scmp.eq.s32.totalorder %s18, 3
      %p120 = por %p118, %p119
      %p121 = scmp.ne.s32.totalorder %s112, %s113
      %p122 = scmp.eq.s32.totalorder %s18, 0
      %p123 = por %p121, %p122
      %p124 = scmp.ne.s32.totalorder %s112, %s113
      %p125 = scmp.eq.s32.totalorder %s19, 3
      %p126 = por %p124, %p125
      %p128 = scmp.ne.s32.totalorder %s113, %s127
      %p129 = scmp.eq.s32.totalorder %s19, 0
      %p130 = por %p128, %p129
      %s132 = sadd.s32 %s131, 1
      %p135 = scmp.eq.s32.totalorder %s13, 3
      %p136 = scmp.ne.s32.totalorder %s131, %s133
      %p137 = scmp.eq.s32.totalorder %s13, 0
      %p138 = por %p136, %p137
      %p139 = scmp.ne.s32.totalorder %s131, %s133
      %p140 = scmp.eq.s32.totalorder %s18, 3
      %p141 = por %p139, %p140
      %p142 = scmp.ne.s32.totalorder %s133, %s134
      %p143 = scmp.eq.s32.totalorder %s18, 0
      %p144 = por %p142, %p143
      %p145 = scmp.ne.s32.totalorder %s133, %s134
      %p146 = scmp.eq.s32.totalorder %s19, 3
      %p147 = por %p145, %p146
      %p149 = scmp.ne.s32.totalorder %s134, %s148
      %p150 = scmp.eq.s32.totalorder %s19, 0
      %p151 = por %p149, %p150
      %s152 = ssub.s32 %s13, %s20
      %p153 = scmp.eq.s32.totalorder %s152, 0
      %s155 = sadd.s32 %s154, 1
      %s156 = scalar_select %p153, %s154, %s155
      %p159 = pneg %p153
      %p160 = scmp.eq.s32.totalorder %s13, 3
      %p161 = por %p159, %p160
      %p162 = scmp.ne.s32.totalorder %s154, %s157
      %p163 = scmp.eq.s32.totalorder %s13, 0
      %p164 = por %p162, %p163
      %p165 = scmp.ne.s32.totalorder %s154, %s157
      %p166 = scmp.eq.s32.totalorder %s18, 3
      %p167 = por %p165, %p166
      %p168 = scmp.ne.s32.totalorder %s157, %s158
      %p169 = scmp.eq.s32.totalorder %s18, 0
      %p170 = por %p168, %p169
      %p171 = scmp.ne.s32.totalorder %s157, %s158
      %p172 = scmp.eq.s32.totalorder %s19, 3
      %p173 = por %p171, %p172
      %p175 = scmp.ne.s32.totalorder %s158, %s174
      %p176 = scmp.eq.s32.totalorder %s19, 0
      %p177 = por %p175, %p176
      %p178 = scmp.le.s32.totalorder 1, %s13
      %p179 = scmp.lt.s32.totalorder %s13, 5
      %p180 = pnand %p178, %p179
      %p181 = pneg %p180
      // Predicated region
      $region9: #{tpu_custom_call.1} parent=5 // pred_check
        _
      $region10: #{tpu_custom_call.1} parent=5 // pred_check_branch
        %183 = sbr.rel (%p180) target = $region12
      $region11: #{tpu_custom_call.1} parent=5 // pred_region
        %s184 = ssub.s32 %s13, 1
        // Predicated region
        $region13: #{tpu_custom_call.1} parent=11 // pred_check
          %p185 = pneg %p60
        $region14: #{tpu_custom_call.1} parent=11 // pred_check_branch
          %187 = sbr.rel (%p185) target = $region16
        $region15: #{tpu_custom_call.1} parent=11 // pred_region
          _
        $region16: #{tpu_custom_call.1} parent=11 // pred_fallthru
          _
        // Predicated region
        $region17: #{tpu_custom_call.1} parent=11 // pred_check
          %p188 = pneg %p81
        $region18: #{tpu_custom_call.1} parent=11 // pred_check_branch
          %190 = sbr.rel (%p188) target = $region20
        $region19: #{tpu_custom_call.1} parent=11 // pred_region
          %s192 = ssub.s32 4096, 4096
          %193 = vsyncadd [#allocation3], %s192
          %s194 = sshll.u32 [#allocation2], 4
          %s195 = int_to_ptr.vmem [resolvable:$true] %s194
          %200 = dma.hbm_to_vmem [thread:$0]  %s2, 4096, %s195, [#allocation3], 128, 128, 8
        $region20: #{tpu_custom_call.1} parent=11 // pred_fallthru
          _
        // Predicated region
        $region21: #{tpu_custom_call.1} parent=11 // pred_check
          %p201 = pneg %p102
        $region22: #{tpu_custom_call.1} parent=11 // pred_check_branch
          %203 = sbr.rel (%p201) target = $region24
        $region23: #{tpu_custom_call.1} parent=11 // pred_region
          _
        $region24: #{tpu_custom_call.1} parent=11 // pred_fallthru
          _
        // Predicated region
        $region25: #{tpu_custom_call.1} parent=11 // pred_check
          %p204 = pneg %p123
        $region26: #{tpu_custom_call.1} parent=11 // pred_check_branch
          %206 = sbr.rel (%p204) target = $region28
        $region27: #{tpu_custom_call.1} parent=11 // pred_region
          _
        $region28: #{tpu_custom_call.1} parent=11 // pred_fallthru
          _
        // Predicated region
        $region29: #{tpu_custom_call.1} parent=11 // pred_check
          %p207 = pneg %p144
        $region30: #{tpu_custom_call.1} parent=11 // pred_check_branch
          %209 = sbr.rel (%p207) target = $region32
        $region31: #{tpu_custom_call.1} parent=11 // pred_region
          _
        $region32: #{tpu_custom_call.1} parent=11 // pred_fallthru
          _
      $region12: #{tpu_custom_call.1} parent=5 // pred_fallthru
        _
      %p210 = scmp.lt.s32.totalorder %s13, 4
      // Predicated region
      $region33: #{tpu_custom_call.1} parent=5 // pred_check
        %p211 = pneg %p210
      $region34: #{tpu_custom_call.1} parent=5 // pred_check_branch
        %213 = sbr.rel (%p211) target = $region36
      $region35: #{tpu_custom_call.1} parent=5 // pred_region
        // Predicated region
        $region37: #{tpu_custom_call.1} parent=35 // pred_check
          %p214 = pneg %p33
        $region38: #{tpu_custom_call.1} parent=35 // pred_check_branch
          %216 = sbr.rel (%p214) target = $region40
        $region39: #{tpu_custom_call.1} parent=35 // pred_region
          %p217 = scmp.lt.s32.totalorder %s13, 3
          %s218 = scalar_select %p217, %s13, 3
          %s219 = smul.addr %s218, 8
          %s220 = scalar_lea.vmem %s0, %s219
        $region40: #{tpu_custom_call.1} parent=35 // pred_fallthru
          _
      $region36: #{tpu_custom_call.1} parent=5 // pred_fallthru
        _
      %p221 = scmp.le.s32.totalorder 1, %s13
      %p222 = scmp.lt.s32.totalorder %s13, 5
      %p223 = pnand %p221, %p222
      %p224 = pneg %p223
      // Predicated region
      $region41: #{tpu_custom_call.1} parent=5 // pred_check
        _
      $region42: #{tpu_custom_call.1} parent=5 // pred_check_branch
        %226 = sbr.rel (%p223) target = $region44
      $region43: #{tpu_custom_call.1} parent=5 // pred_region
        %s227 = ssub.s32 %s13, 1
        // Predicated region
        $region45: #{tpu_custom_call.1} parent=43 // pred_check
          %p228 = pneg %p81
        $region46: #{tpu_custom_call.1} parent=43 // pred_check_branch
          %230 = sbr.rel (%p228) target = $region48
        $region47: #{tpu_custom_call.1} parent=43 // pred_region
          %231 = dma.done [#allocation3], 4096
        $region48: #{tpu_custom_call.1} parent=43 // pred_fallthru
          _
        %p232 = scmp.lt.s32.totalorder %s18, 3
        %s233 = scalar_select %p232, %s18, 3
        %s234 = smul.addr %s233, 8
        %s235 = scalar_lea.vmem %s0, %s234
        %p236 = pneg %p39
        %p237 = pneg %p36
        %p238 = pneg %p60
        %p239 = pneg %p57
        %p240 = pneg %p81
        %p241 = pneg %p78
        %p242 = pneg %p102
        %p243 = pneg %p99
        %p244 = pneg %p123
        %p245 = pneg %p120
        %p246 = pneg %p144
        %p247 = pneg %p141
        %p248 = pneg %p170
        %p249 = pneg %p167
        %p250 = scmp.lt.s32.totalorder %s18, 3
        %s251 = scalar_select %p250, %s18, 3
        %s252 = smul.addr %s251, 2
        %s253 = smul.addr %s252, 8
        %s254 = scalar_lea.vmem %s6, %s253
        %p255 = scmp.lt.s32.totalorder %s18, 3
        %s256 = scalar_select %p255, %s18, 3
        %s257 = smul.addr %s256, 8
        %s258 = scalar_lea.vmem %s0, %s257
        %p259 = scmp.lt.s32.totalorder %s18, 3
        %s260 = scalar_select %p259, %s18, 3
        %s261 = smul.addr %s260, 2
        %s262 = smul.addr %s261, 8
        %s263 = scalar_lea.vmem %s6, %s262
        %v264 = vld [vmem:[%s258] sm:$0xff]
        %v265 = vld [vmem:[%s5] ss:$4 sm:$0x3]
        %v266 = vld [vmem:[%s5 + $0x1] sm:$0x1]
        %v267 = vld [vmem:[%s5 + $0x2] sm:$0x1]
        %v268 = vld [vmem:[%s5 + $0x3] sm:$0x1]
        %v269 = vld [vmem:[%s1] sm:$0xff]
        %v270 = vld [vmem:[%s1 + $0x8] sm:$0xff]
        %v271 = vld [vmem:[%s1 + $0x10] sm:$0xff]
        %v272 = vld [vmem:[%s1 + $0x18] sm:$0xff]
        %v273 = vld [vmem:[%s1 + $0x20] sm:$0xff]
        %v274 = vld [vmem:[%s1 + $0x28] sm:$0xff]
        %v275 = vld [vmem:[%s1 + $0x30] sm:$0xff]
        %v276 = vld [vmem:[%s1 + $0x38] sm:$0xff]
        %v278 = vlaneseq
        %v279 = vshrl.u32 %v278, 7
        %v280 = vsub.s32 0, %v279
        %v281 = vrot.slane %v265, %v280
        %v282 = vlaneseq
        %v283 = vshrl.u32 %v282, 7
        %v284 = vsub.s32 1, %v283
        %v285 = vrot.slane %v265, %v284
        %vm288 = vcmask 261120
        %v290 = vsel %vm288, %v264, 0
        %292 = vmatprep.subr.mxu0 0.0
        %293 = vmatpush1.msra.mxu0 0.0
        %294 = vmatprep.subr.mxu0 0.0
        %295 = vmatpush1.msra.mxu0 0.0
        %296 = vmatprep.subr.mxu0 0.0
        %297 = vmatpush1.msra.mxu0 0.0
        %298 = vmatprep.subr.mxu0 0.0
        %299 = vmatpush1.msra.mxu0 0.0
        %300 = vmatprep.subr.mxu0 0.0
        %301 = vmatpush1.msra.mxu0 0.0
        %302 = vmatprep.subr.mxu0 0.0
        %303 = vmatpush1.msra.mxu0 0.0
        %304 = vmatprep.subr.mxu0 0.0
        %305 = vmatpush1.msra.mxu0 0.0
        %306 = vmatprep.subr.mxu0 0.0
        %307 = vmatpush1.msra.mxu0 0.0
        %308 = vmatprep.subr.mxu0 0.0
        %309 = vmatpush1.msra.mxu0 0.0
        %310 = vmatprep.subr.mxu0 0.0
        %311 = vmatpush1.msra.mxu0 0.0
        %312 = vmatprep.subr.mxu0 0.0
        %313 = vmatpush1.msra.mxu0 0.0
        %314 = vmatprep.subr.mxu0 0.0
        %315 = vmatpush1.msra.mxu0 0.0
        %316 = vmatprep.subr.mxu0 %v276
        %317 = vmatpush1.msra.mxu0 %v275
        %318 = vmatprep.subr.mxu0 %v274
        %319 = vmatpush1.msra.mxu0 %v273
        %320 = vmatprep.subr.mxu0 %v272
        %321 = vmatpush1.msra.mxu0 %v271
        %322 = vmatprep.subr.mxu0 %v270
        %323 = vmatpush1.msra.mxu0 %v269
        %324 = vmatprep.subr.mxu0 0.0
        %325 = vmatpush2.msra.mxu0 0.0
        %326 = vmatprep.subr.mxu0 0.0
        %327 = vmatpush2.msra.mxu0 0.0
        %328 = vmatprep.subr.mxu0 0.0
        %329 = vmatpush2.msra.mxu0 0.0
        %330 = vmatprep.subr.mxu0 0.0
        %331 = vmatpush2.msra.mxu0 0.0
        %332 = vmatprep.subr.mxu0 0.0
        %333 = vmatpush2.msra.mxu0 0.0
        %334 = vmatprep.subr.mxu0 0.0
        %335 = vmatpush2.msra.mxu0 0.0
        %336 = vmatprep.subr.mxu0 0.0
        %337 = vmatpush2.msra.mxu0 0.0
        %338 = vmatprep.subr.mxu0 0.0
        %339 = vmatpush2.msra.mxu0 0.0
        %340 = vmatprep.subr.mxu0 0.0
        %341 = vmatpush2.msra.mxu0 0.0
        %342 = vmatprep.subr.mxu0 0.0
        %343 = vmatpush2.msra.mxu0 0.0
        %344 = vmatprep.subr.mxu0 0.0
        %345 = vmatpush2.msra.mxu0 0.0
        %346 = vmatprep.subr.mxu0 0.0
        %347 = vmatpush2.msra.mxu0 0.0
        %348 = vmatprep.subr.mxu0 0.0
        %349 = vmatpush2.msra.mxu0 0.0
        %350 = vmatprep.subr.mxu0 0.0
        %351 = vmatpush2.msra.mxu0 0.0
        %352 = vmatprep.subr.mxu0 0.0
        %353 = vmatpush2.msra.mxu0 0.0
        %354 = vmatprep.subr.mxu0 0.0
        %355 = vmatpush2.msra.mxu0 0.0
        %356 = vmatprep.mubr.f32.mxu0 0.0
        %357 = vmatmul.mubr.f32.gmra.mxu0 %v290
        %v358 = vpop.f32.mrf.mxu0
        %v359 = vadd.f32 %v281, %v358
        %v360 = vpop.f32.mrf.mxu0
        %v361 = vadd.f32 %v285, %v360
        %362 = vdwg.mxu0
        %v363 = vmax.f32 %v359, 0.0
        %v364 = vmax.f32 %v361, 0.0
        %v365 = vld [vmem:[#allocation2] sm:$0xff]
        %v366 = vld [vmem:[#allocation2 + $0x8] sm:$0xff]
        %v367 = vld [vmem:[#allocation2 + $0x10] sm:$0xff]
        %v368 = vld [vmem:[#allocation2 + $0x18] sm:$0xff]
        %v369 = vld [vmem:[#allocation2 + $0x20] sm:$0xff]
        %v370 = vld [vmem:[#allocation2 + $0x28] sm:$0xff]
        %v371 = vld [vmem:[#allocation2 + $0x30] sm:$0xff]
        %v372 = vld [vmem:[#allocation2 + $0x38] sm:$0xff]
        %v373 = vld [vmem:[#allocation2 + $0x40] sm:$0xff]
        %v374 = vld [vmem:[#allocation2 + $0x48] sm:$0xff]
        %v375 = vld [vmem:[#allocation2 + $0x50] sm:$0xff]
        %v376 = vld [vmem:[#allocation2 + $0x58] sm:$0xff]
        %v377 = vld [vmem:[#allocation2 + $0x60] sm:$0xff]
        %v378 = vld [vmem:[#allocation2 + $0x68] sm:$0xff]
        %v379 = vld [vmem:[#allocation2 + $0x70] sm:$0xff]
        %v380 = vld [vmem:[#allocation2 + $0x78] sm:$0xff]
        %v381 = vld [vmem:[#allocation2 + $0x80] sm:$0xff]
        %v382 = vld [vmem:[#allocation2 + $0x88] sm:$0xff]
        %v383 = vld [vmem:[#allocation2 + $0x90] sm:$0xff]
        %v384 = vld [vmem:[#allocation2 + $0x98] sm:$0xff]
        %v385 = vld [vmem:[#allocation2 + $0xa0] sm:$0xff]
        %v386 = vld [vmem:[#allocation2 + $0xa8] sm:$0xff]
        %v387 = vld [vmem:[#allocation2 + $0xb0] sm:$0xff]
        %v388 = vld [vmem:[#allocation2 + $0xb8] sm:$0xff]
        %v389 = vld [vmem:[#allocation2 + $0xc0] sm:$0xff]
        %v390 = vld [vmem:[#allocation2 + $0xc8] sm:$0xff]
        %v391 = vld [vmem:[#allocation2 + $0xd0] sm:$0xff]
        %v392 = vld [vmem:[#allocation2 + $0xd8] sm:$0xff]
        %v393 = vld [vmem:[#allocation2 + $0xe0] sm:$0xff]
        %v394 = vld [vmem:[#allocation2 + $0xe8] sm:$0xff]
        %v395 = vld [vmem:[#allocation2 + $0xf0] sm:$0xff]
        %v396 = vld [vmem:[#allocation2 + $0xf8] sm:$0xff]
        %v397 = vlaneseq
        %v398 = vshrl.u32 %v397, 7
        %v399 = vsub.s32 0, %v398
        %v400 = vrot.slane %v266, %v399
        %401 = vmatprep.subr.mxu0 0.0
        %402 = vmatpush1.msra.mxu0 %v380
        %403 = vmatprep.subr.mxu0 0.0
        %404 = vmatpush1.msra.mxu0 %v379
        %405 = vmatprep.subr.mxu0 0.0
        %406 = vmatpush1.msra.mxu0 %v378
        %407 = vmatprep.subr.mxu0 0.0
        %408 = vmatpush1.msra.mxu0 %v377
        %409 = vmatprep.subr.mxu0 0.0
        %410 = vmatpush1.msra.mxu0 %v376
        %411 = vmatprep.subr.mxu0 0.0
        %412 = vmatpush1.msra.mxu0 %v375
        %413 = vmatprep.subr.mxu0 0.0
        %414 = vmatpush1.msra.mxu0 %v374
        %415 = vmatprep.subr.mxu0 0.0
        %416 = vmatpush1.msra.mxu0 %v373
        %417 = vmatprep.subr.mxu0 0.0
        %418 = vmatpush1.msra.mxu0 %v372
        %419 = vmatprep.subr.mxu0 0.0
        %420 = vmatpush1.msra.mxu0 %v371
        %421 = vmatprep.subr.mxu0 0.0
        %422 = vmatpush1.msra.mxu0 %v370
        %423 = vmatprep.subr.mxu0 0.0
        %424 = vmatpush1.msra.mxu0 %v369
        %425 = vmatprep.subr.mxu0 0.0
        %426 = vmatpush1.msra.mxu0 %v368
        %427 = vmatprep.subr.mxu0 0.0
        %428 = vmatpush1.msra.mxu0 %v367
        %429 = vmatprep.subr.mxu0 0.0
        %430 = vmatpush1.msra.mxu0 %v366
        %431 = vmatprep.subr.mxu0 0.0
        %432 = vmatpush1.msra.mxu0 %v365
        %433 = vmatprep.subr.mxu0 0.0
        %434 = vmatpush2.msra.mxu0 %v396
        %435 = vmatprep.subr.mxu0 0.0
        %436 = vmatpush2.msra.mxu0 %v395
        %437 = vmatprep.subr.mxu0 0.0
        %438 = vmatpush2.msra.mxu0 %v394
        %439 = vmatprep.subr.mxu0 0.0
        %440 = vmatpush2.msra.mxu0 %v393
        %441 = vmatprep.subr.mxu0 0.0
        %442 = vmatpush2.msra.mxu0 %v392
        %443 = vmatprep.subr.mxu0 0.0
        %444 = vmatpush2.msra.mxu0 %v391
        %445 = vmatprep.subr.mxu0 0.0
        %446 = vmatpush2.msra.mxu0 %v390
        %447 = vmatprep.subr.mxu0 0.0
        %448 = vmatpush2.msra.mxu0 %v389
        %449 = vmatprep.subr.mxu0 0.0
        %450 = vmatpush2.msra.mxu0 %v388
        %451 = vmatprep.subr.mxu0 0.0
        %452 = vmatpush2.msra.mxu0 %v387
        %453 = vmatprep.subr.mxu0 0.0
        %454 = vmatpush2.msra.mxu0 %v386
        %455 = vmatprep.subr.mxu0 0.0
        %456 = vmatpush2.msra.mxu0 %v385
        %457 = vmatprep.subr.mxu0 0.0
        %458 = vmatpush2.msra.mxu0 %v384
        %459 = vmatprep.subr.mxu0 0.0
        %460 = vmatpush2.msra.mxu0 %v383
        %461 = vmatprep.subr.mxu0 0.0
        %462 = vmatpush2.msra.mxu0 %v382
        %463 = vmatprep.subr.mxu0 0.0
        %464 = vmatpush2.msra.mxu0 %v381
        %465 = vmatprep.mubr.f32.mxu0 %v364
        %466 = vmatmul.mubr.f32.gmra.mxu0 %v363
        %v467 = vpop.f32.mrf.mxu0
        %v468 = vadd.f32 %v400, %v467
        %v469 = vpop.f32.mrf.mxu0
        %470 = vdwg.mxu0
        %v471 = vmax.f32 %v468, 0.0
        %v472 = vld [vmem:[%s3] sm:$0xff]
        %v473 = vld [vmem:[%s3 + $0x8] sm:$0xff]
        %v474 = vld [vmem:[%s3 + $0x10] sm:$0xff]
        %v475 = vld [vmem:[%s3 + $0x18] sm:$0xff]
        %v476 = vld [vmem:[%s3 + $0x20] sm:$0xff]
        %v477 = vld [vmem:[%s3 + $0x28] sm:$0xff]
        %v478 = vld [vmem:[%s3 + $0x30] sm:$0xff]
        %v479 = vld [vmem:[%s3 + $0x38] sm:$0xff]
        %v480 = vld [vmem:[%s3 + $0x40] sm:$0xff]
        %v481 = vld [vmem:[%s3 + $0x48] sm:$0xff]
        %v482 = vld [vmem:[%s3 + $0x50] sm:$0xff]
        %v483 = vld [vmem:[%s3 + $0x58] sm:$0xff]
        %v484 = vld [vmem:[%s3 + $0x60] sm:$0xff]
        %v485 = vld [vmem:[%s3 + $0x68] sm:$0xff]
        %v486 = vld [vmem:[%s3 + $0x70] sm:$0xff]
        %v487 = vld [vmem:[%s3 + $0x78] sm:$0xff]
        %v488 = vlaneseq
        %v489 = vshrl.u32 %v488, 7
        %v490 = vsub.s32 0, %v489
        %v491 = vrot.slane %v267, %v490
        %492 = vmatprep.subr.mxu0 0.0
        %493 = vmatpush1.msra.mxu0 %v487
        %494 = vmatprep.subr.mxu0 0.0
        %495 = vmatpush1.msra.mxu0 %v486
        %496 = vmatprep.subr.mxu0 0.0
        %497 = vmatpush1.msra.mxu0 %v485
        %498 = vmatprep.subr.mxu0 0.0
        %499 = vmatpush1.msra.mxu0 %v484
        %500 = vmatprep.subr.mxu0 0.0
        %501 = vmatpush1.msra.mxu0 %v483
        %502 = vmatprep.subr.mxu0 0.0
        %503 = vmatpush1.msra.mxu0 %v482
        %504 = vmatprep.subr.mxu0 0.0
        %505 = vmatpush1.msra.mxu0 %v481
        %506 = vmatprep.subr.mxu0 0.0
        %507 = vmatpush1.msra.mxu0 %v480
        %508 = vmatprep.subr.mxu0 0.0
        %509 = vmatpush1.msra.mxu0 %v479
        %510 = vmatprep.subr.mxu0 0.0
        %511 = vmatpush1.msra.mxu0 %v478
        %512 = vmatprep.subr.mxu0 0.0
        %513 = vmatpush1.msra.mxu0 %v477
        %514 = vmatprep.subr.mxu0 0.0
        %515 = vmatpush1.msra.mxu0 %v476
        %516 = vmatprep.subr.mxu0 0.0
        %517 = vmatpush1.msra.mxu0 %v475
        %518 = vmatprep.subr.mxu0 0.0
        %519 = vmatpush1.msra.mxu0 %v474
        %520 = vmatprep.subr.mxu0 0.0
        %521 = vmatpush1.msra.mxu0 %v473
        %522 = vmatprep.subr.mxu0 0.0
        %523 = vmatpush1.msra.mxu0 %v472
        %524 = vmatprep.subr.mxu0 0.0
        %525 = vmatpush2.msra.mxu0 0.0
        %526 = vmatprep.subr.mxu0 0.0
        %527 = vmatpush2.msra.mxu0 0.0
        %528 = vmatprep.subr.mxu0 0.0
        %529 = vmatpush2.msra.mxu0 0.0
        %530 = vmatprep.subr.mxu0 0.0
        %531 = vmatpush2.msra.mxu0 0.0
        %532 = vmatprep.subr.mxu0 0.0
        %533 = vmatpush2.msra.mxu0 0.0
        %534 = vmatprep.subr.mxu0 0.0
        %535 = vmatpush2.msra.mxu0 0.0
        %536 = vmatprep.subr.mxu0 0.0
        %537 = vmatpush2.msra.mxu0 0.0
        %538 = vmatprep.subr.mxu0 0.0
        %539 = vmatpush2.msra.mxu0 0.0
        %540 = vmatprep.subr.mxu0 0.0
        %541 = vmatpush2.msra.mxu0 0.0
        %542 = vmatprep.subr.mxu0 0.0
        %543 = vmatpush2.msra.mxu0 0.0
        %544 = vmatprep.subr.mxu0 0.0
        %545 = vmatpush2.msra.mxu0 0.0
        %546 = vmatprep.subr.mxu0 0.0
        %547 = vmatpush2.msra.mxu0 0.0
        %548 = vmatprep.subr.mxu0 0.0
        %549 = vmatpush2.msra.mxu0 0.0
        %550 = vmatprep.subr.mxu0 0.0
        %551 = vmatpush2.msra.mxu0 0.0
        %552 = vmatprep.subr.mxu0 0.0
        %553 = vmatpush2.msra.mxu0 0.0
        %554 = vmatprep.subr.mxu0 0.0
        %555 = vmatpush2.msra.mxu0 0.0
        %556 = vmatprep.mubr.f32.mxu0 0.0
        %557 = vmatmul.mubr.f32.gmra.mxu0 %v471
        %v558 = vpop.f32.mrf.mxu0
        %v559 = vadd.f32 %v491, %v558
        %v560 = vpop.f32.mrf.mxu0
        %561 = vdwg.mxu0
        %v562 = vmax.f32 %v559, 0.0
        %v563 = vld [vmem:[%s4] sm:$0xff]
        %v564 = vld [vmem:[%s4 + $0x8] sm:$0xff]
        %v565 = vld [vmem:[%s4 + $0x10] sm:$0xff]
        %v566 = vld [vmem:[%s4 + $0x18] sm:$0xff]
        %v567 = vld [vmem:[%s4 + $0x20] sm:$0xff]
        %v568 = vld [vmem:[%s4 + $0x28] sm:$0xff]
        %v569 = vld [vmem:[%s4 + $0x30] sm:$0xff]
        %v570 = vld [vmem:[%s4 + $0x38] sm:$0xff]
        %v571 = vlaneseq
        %v572 = vshrl.u32 %v571, 7
        %v573 = vsub.s32 0, %v572
        %v574 = vrot.slane %v268, %v573
        %vm575 = vcmask 523264
        %v577 = vsel %vm575, %v562, 0
        %579 = vmatprep.subr.mxu0 0.0
        %580 = vmatpush1.msra.mxu0 0.0
        %581 = vmatprep.subr.mxu0 0.0
        %582 = vmatpush1.msra.mxu0 0.0
        %583 = vmatprep.subr.mxu0 0.0
        %584 = vmatpush1.msra.mxu0 0.0
        %585 = vmatprep.subr.mxu0 0.0
        %586 = vmatpush1.msra.mxu0 0.0
        %587 = vmatprep.subr.mxu0 0.0
        %588 = vmatpush1.msra.mxu0 0.0
        %589 = vmatprep.subr.mxu0 0.0
        %590 = vmatpush1.msra.mxu0 0.0
        %591 = vmatprep.subr.mxu0 0.0
        %592 = vmatpush1.msra.mxu0 0.0
        %593 = vmatprep.subr.mxu0 0.0
        %594 = vmatpush1.msra.mxu0 0.0
        %595 = vmatprep.subr.mxu0 0.0
        %596 = vmatpush1.msra.mxu0 %v570
        %597 = vmatprep.subr.mxu0 0.0
        %598 = vmatpush1.msra.mxu0 %v569
        %599 = vmatprep.subr.mxu0 0.0
        %600 = vmatpush1.msra.mxu0 %v568
        %601 = vmatprep.subr.mxu0 0.0
        %602 = vmatpush1.msra.mxu0 %v567
        %603 = vmatprep.subr.mxu0 0.0
        %604 = vmatpush1.msra.mxu0 %v566
        %605 = vmatprep.subr.mxu0 0.0
        %606 = vmatpush1.msra.mxu0 %v565
        %607 = vmatprep.subr.mxu0 0.0
        %608 = vmatpush1.msra.mxu0 %v564
        %609 = vmatprep.subr.mxu0 0.0
        %610 = vmatpush1.msra.mxu0 %v563
        %611 = vmatprep.subr.mxu0 0.0
        %612 = vmatpush2.msra.mxu0 0.0
        %613 = vmatprep.subr.mxu0 0.0
        %614 = vmatpush2.msra.mxu0 0.0
        %615 = vmatprep.subr.mxu0 0.0
        %616 = vmatpush2.msra.mxu0 0.0
        %617 = vmatprep.subr.mxu0 0.0
        %618 = vmatpush2.msra.mxu0 0.0
        %619 = vmatprep.subr.mxu0 0.0
        %620 = vmatpush2.msra.mxu0 0.0
        %621 = vmatprep.subr.mxu0 0.0
        %622 = vmatpush2.msra.mxu0 0.0
        %623 = vmatprep.subr.mxu0 0.0
        %624 = vmatpush2.msra.mxu0 0.0
        %625 = vmatprep.subr.mxu0 0.0
        %626 = vmatpush2.msra.mxu0 0.0
        %627 = vmatprep.subr.mxu0 0.0
        %628 = vmatpush2.msra.mxu0 0.0
        %629 = vmatprep.subr.mxu0 0.0
        %630 = vmatpush2.msra.mxu0 0.0
        %631 = vmatprep.subr.mxu0 0.0
        %632 = vmatpush2.msra.mxu0 0.0
        %633 = vmatprep.subr.mxu0 0.0
        %634 = vmatpush2.msra.mxu0 0.0
        %635 = vmatprep.subr.mxu0 0.0
        %636 = vmatpush2.msra.mxu0 0.0
        %637 = vmatprep.subr.mxu0 0.0
        %638 = vmatpush2.msra.mxu0 0.0
        %639 = vmatprep.subr.mxu0 0.0
        %640 = vmatpush2.msra.mxu0 0.0
        %641 = vmatprep.subr.mxu0 0.0
        %642 = vmatpush2.msra.mxu0 0.0
        %643 = vmatprep.mubr.f32.mxu0 0.0
        %644 = vmatmul.mubr.f32.gmra.mxu0 %v577
        %v645 = vpop.f32.mrf.mxu0
        %v646 = vadd.f32 %v574, %v645
        %v647 = vpop.f32.mrf.mxu0
        %648 = vdwg.mxu0
        %v649 = vlaneseq
        %v650 = vand.u32 %v649, 127
        %vm651 = vcmp.lt.s32.totalorder %v650, 4
        %v652 = vsel %vm651, %v646, -inf
        %653 = vmax.xlane.f32.xlu0 %v652
        %v654 = vpop.xlane.xlu0 %653
        %v655 = vrot.slane %v654, 4
        %v656 = vmax.f32 %v654, %v655
        %v657 = vrot.slane %v656, 2
        %v658 = vmax.f32 %v656, %v657
        %v659 = vrot.slane %v658, 1
        %v660 = vmax.f32 %v658, %v659
        %s661 = vtos %v660
        %v662 = vstv %s661
        %v663 = vsub.f32 %v652, %v662
        %v664 = vmul.f32 %v663, 1.442695
        %v665 = vpow.pop %v664
        %666 = vadd.xlane.f32.xlu0 %v665
        %v667 = vpop.xlane.xlu0 %666
        %v668 = vrot.slane %v667, 4
        %v669 = vadd.f32 %v667, %v668
        %v670 = vrot.slane %v669, 2
        %v671 = vadd.f32 %v669, %v670
        %v672 = vrot.slane %v671, 1
        %v673 = vadd.f32 %v671, %v672
        %v674 = vrcp.pop %v673
        %v675 = vmul.f32 %v667, %v674
        %v676 = vmul.f32 %v675, 8.0
        %v677 = vmul.f32 %v562, %v676
        %v678 = vsel %vm575, %v677, 0.0
        %v679 = vrot.slane %v678, 4
        %v680 = vadd.f32 %v678, %v679
        %v681 = vrot.slane %v680, 2
        %v682 = vadd.f32 %v680, %v681
        %v683 = vrot.slane %v682, 1
        %v684 = vadd.f32 %v682, %v683
        %v685 = vrcp.pop 8.0
        %v686 = vmul.f32 %v684, %v685
        %v687 = vsel %vm651, %v646, 0.0
        %vm688 = vcmp.eq.s32.totalorder %v650, 4
        %v689 = vsel %vm688, %v675, 0.0
        %v690 = vadd.f32 %v687, %v689
        %691 = vst [vmem:[%s263] sm:$0xff] %v690
        %v692 = vsel %vm575, %v686, 0.0
        %693 = vst [vmem:[%s263 + $0x8] sm:$0x1] %v692
        %p694 = scmp.lt.s32.totalorder %s18, 3
        %s695 = scalar_select %p694, %s18, 3
        %s696 = smul.addr %s695, 2
        %s697 = smul.addr %s696, 8
        %s698 = scalar_lea.vmem %s6, %s697
        // Predicated region
        $region49: #{tpu_custom_call.1} parent=43 // pred_check
          %p699 = pneg %p167
        $region50: #{tpu_custom_call.1} parent=43 // pred_check_branch
          %701 = sbr.rel (%p699) target = $region52
        $region51: #{tpu_custom_call.1} parent=43 // pred_region
          _
        $region52: #{tpu_custom_call.1} parent=43 // pred_fallthru
          _
      $region44: #{tpu_custom_call.1} parent=5 // pred_fallthru
        _
      %p702 = scmp.le.s32.totalorder 2, %s13
      // Predicated region
      $region53: #{tpu_custom_call.1} parent=5 // pred_check
        %p703 = pneg %p702
      $region54: #{tpu_custom_call.1} parent=5 // pred_check_branch
        %705 = sbr.rel (%p703) target = $region56
      $region55: #{tpu_custom_call.1} parent=5 // pred_region
        %s706 = ssub.s32 %s13, 2
        // Predicated region
        $region57: #{tpu_custom_call.1} parent=55 // pred_check
          %p707 = pneg %p173
        $region58: #{tpu_custom_call.1} parent=55 // pred_check_branch
          %709 = sbr.rel (%p707) target = $region60
        $region59: #{tpu_custom_call.1} parent=55 // pred_region
          %p710 = scmp.lt.s32.totalorder %s19, 3
          %s711 = scalar_select %p710, %s19, 3
          %s712 = smul.addr %s711, 2
          %s713 = smul.addr %s712, 8
          %s714 = scalar_lea.vmem %s6, %s713
        $region60: #{tpu_custom_call.1} parent=55 // pred_fallthru
          _
      $region56: #{tpu_custom_call.1} parent=5 // pred_fallthru
        _
    $region6: #{tpu_custom_call.1} parent=1 // loop_footer
      %s17 = sadd.s32 1, %s13
    $region7: #{tpu_custom_call.1} parent=1 // loop_footer_branch
      %12 = sbr.rel target = $region3
    $region8: #{tpu_custom_call.1} parent=1 // loop_exit
      _
    %715 = vsyncpa [#allocation3], 1
    %s716 = scalar_lea.sflag [#allocation3], 1
    %717 = vsyncpa %s716, 1

</llo_original>
